<compile_context>
chip_gen: v7x
topology: tpu7x:2x2x1
jax: 0.10.0
libtpu: 0.0.40
codegen_flags: <defaults>
</compile_context>

<pallas_src>
import functools

import jax
import jax.numpy as jnp
from jax.experimental import pallas as pl
from jax.experimental.pallas import tpu as pltpu

_NEG_BIG = -1e30  # finite "minus infinity": exp() underflows to 0, no inf-inf NaNs


def _round_up(x, m):
    return ((x + m - 1) // m) * m


def _ce_kernel(logits_ref, tgt_ref, out_ref, m_sc, l_sc, picked_sc, *,
               n_valid, tn, tc):
    """One (TN, TC) tile of the cross-entropy reduction.

    logits_ref : (TN, TC)  input dtype (bf16/f32), upcast to f32 here
    tgt_ref    : (TN, 1)   int32 class indices
    out_ref    : (1, 8, 128) f32 partial sum for this batch tile (lane-dense)
    m_sc/l_sc/picked_sc : (TN, 1) f32 running max / running sum / gathered logit
    """
    i = pl.program_id(0)           # batch-tile index
    j = pl.program_id(1)           # class-tile index
    nj = pl.num_programs(1)

    @pl.when(j == 0)
    def _init():
        m_sc[...] = jnp.full_like(m_sc, _NEG_BIG)
        l_sc[...] = jnp.zeros_like(l_sc)
        picked_sc[...] = jnp.zeros_like(picked_sc)

    logits = logits_ref[...].astype(jnp.float32)            # (TN, TC)
    tgt = tgt_ref[...]                                       # (TN, 1) int32

    # --- online logsumexp over the class axis (one exp per element) ---
    m_old = m_sc[...]
    m_new = jnp.maximum(m_old, jnp.max(logits, axis=-1, keepdims=True))
    p = jnp.exp(logits - m_new)                              # (TN, TC)
    l_sc[...] = l_sc[...] * jnp.exp(m_old - m_new) + jnp.sum(p, axis=-1,
                                                             keepdims=True)
    m_sc[...] = m_new

    # --- fold the target gather into the same pass (VPU compare/select,
    #     single extra XLU reduction). Offset the iota by this C-tile start.
    col = jax.lax.broadcasted_iota(jnp.int32, logits.shape, 1) + j * tc
    picked_sc[...] += jnp.sum(jnp.where(col == tgt, logits, 0.0), axis=-1,
                              keepdims=True)

    # --- finalize: per-row loss, mask padded rows, emit tile partial sum ---
    @pl.when(j == nj - 1)
    def _finalize():
        lse = m_sc[...] + jnp.log(l_sc[...])                 # (TN, 1)
        per_row = lse - picked_sc[...]                       # (TN, 1)
        row_id = i * tn + jax.lax.broadcasted_iota(jnp.int32, per_row.shape, 0)
        per_row = jnp.where(row_id < n_valid, per_row, 0.0)
        tile_sum = jnp.sum(per_row)
        out_ref[...] = jnp.broadcast_to(tile_sum, out_ref.shape).astype(
            jnp.float32)


def loss_ce(logits, targets):
    """Pallas cross-entropy, reduction='mean'.

    logits : (N, C) float32 or bfloat16
    targets: (N,)   integer class indices in [0, C)
    """
    n, c = logits.shape

    # Tile sizes: 256 x 2048 f32 block = 2 MiB (4 MiB double-buffered),
    # comfortably inside the scoped VMEM limit on v5e/v6e/v7x while big enough
    # to sit at the HBM roofline.
    tn = min(256, _round_up(n, 8))
    tc = min(2048, _round_up(c, 128))
    n_pad = _round_up(n, tn)
    c_pad = _round_up(c, tc)
    n_tiles = n_pad // tn
    c_tiles = c_pad // tc

    # Pad: classes with a large negative (exp -> 0, never matches a target);
    # rows with the same value (they are masked inside the kernel).
    logits_p = jnp.pad(logits, ((0, n_pad - n), (0, c_pad - c)),
                       constant_values=_NEG_BIG)
    targets_p = jnp.pad(targets.astype(jnp.int32), (0, n_pad - n),
                        constant_values=0).reshape(n_pad, 1)

    kernel = functools.partial(_ce_kernel, n_valid=n, tn=tn, tc=tc)

    partials = pl.pallas_call(
        kernel,
        out_shape=jax.ShapeDtypeStruct((n_tiles, 8, 128), jnp.float32),
        grid_spec=pltpu.PrefetchScalarGridSpec(
            num_scalar_prefetch=0,
            grid=(n_tiles, c_tiles),
            in_specs=[
                pl.BlockSpec((tn, tc), lambda i, j: (i, j)),
                pl.BlockSpec((tn, 1), lambda i, j: (i, 0)),
            ],
            out_specs=pl.BlockSpec((1, 8, 128), lambda i, j: (i, 0, 0)),
            scratch_shapes=[
                pltpu.VMEM((tn, 1), jnp.float32),   # running max
                pltpu.VMEM((tn, 1), jnp.float32),   # running sum of exp
                pltpu.VMEM((tn, 1), jnp.float32),   # gathered target logit
            ],
        ),
        compiler_params=pltpu.CompilerParams(
            dimension_semantics=("parallel", "arbitrary"),
            vmem_limit_bytes=32 * 1024 * 1024,
        ),
    )(logits_p, targets_p)

    # Final mean in plain JAX over the per-tile partial sums.
    return jnp.sum(partials[:, 0, 0]) / n


def _ce_reference(logits, targets):
    logits32 = logits.astype(jnp.float32)
    lse = jax.nn.logsumexp(logits32, axis=-1)
    picked = jnp.take_along_axis(logits32, targets[:, None].astype(jnp.int32),
                                 axis=-1)[:, 0]
    return jnp.mean(lse - picked)


# TODO(synk): ignore_index / label smoothing / soft (probability) targets of
# torch.nn.CrossEntropyLoss are not implemented; defaults (hard class indices,
# reduction='mean') match this kernel.

if __name__ == "__main__":
    key = jax.random.PRNGKey(0)

    # Case 1: small aligned shapes, f32.
    k1, k2, k3, k4, k5, k6 = jax.random.split(key, 6)
    N, C = 8, 32
    logits = jax.random.normal(k1, (N, C), dtype=jnp.float32)
    targets = jax.random.randint(k2, (N,), 0, C, dtype=jnp.int32)
    loss = loss_ce(logits, targets)
    jax.block_until_ready(loss)
    ref = _ce_reference(logits, targets)
    assert jnp.allclose(loss, ref, atol=1e-5, rtol=1e-5), (loss, ref)

    # Case 2: ragged shapes (exercise row/class padding + masking), f32.
    N2, C2 = 13, 200
    logits2 = jax.random.normal(k3, (N2, C2), dtype=jnp.float32)
    targets2 = jax.random.randint(k4, (N2,), 0, C2, dtype=jnp.int32)
    loss2 = loss_ce(logits2, targets2)
    jax.block_until_ready(loss2)
    ref2 = _ce_reference(logits2, targets2)
    assert jnp.allclose(loss2, ref2, atol=1e-5, rtol=1e-5), (loss2, ref2)

    # Case 3: bf16 logits (halved HBM traffic path), upcast happens in-kernel.
    N3, C3 = 16, 256
    logits3 = jax.random.normal(k5, (N3, C3), dtype=jnp.float32).astype(
        jnp.bfloat16)
    targets3 = jax.random.randint(k6, (N3,), 0, C3, dtype=jnp.int32)
    loss3 = loss_ce(logits3, targets3)
    jax.block_until_ready(loss3)
    ref3 = _ce_reference(logits3, targets3)
    assert jnp.allclose(loss3, ref3, atol=1e-4, rtol=1e-4), (loss3, ref3)

    print("KERNEL_OK")
</pallas_src>

<mosaic_0001>
module attributes {stable_mosaic.version = 11 : i64} {
  func.func @_ce_kernel(%arg0: i32, %arg1: i32, %arg2: memref<8x128xf32, #tpu.memory_space<vmem>>, %arg3: memref<8x1xi32, #tpu.memory_space<vmem>>, %arg4: memref<1x8x128xf32, #tpu.memory_space<vmem>>, %arg5: memref<8x1xf32, #tpu.memory_space<vmem>>, %arg6: memref<8x1xf32, #tpu.memory_space<vmem>>, %arg7: memref<8x1xf32, #tpu.memory_space<vmem>>) attributes {dimension_semantics = [#tpu.dimension_semantics<parallel>, #tpu.dimension_semantics<arbitrary>], iteration_bounds = array<i64: 1, 1>, scalar_prefetch = 0 : i64, scratch_operands = 3 : i64, tpu.core_type = #tpu.core_type<tc>, window_params = [{transform_indices = @transform_0, window_bounds = array<i64: 8, 128>}, {transform_indices = @transform_1, window_bounds = array<i64: 8, 1>}, {transform_indices = @transform_2, window_bounds = array<i64: 1, 8, 128>}]} {
    %c0_i32 = arith.constant 0 : i32
    %0 = arith.cmpi eq, %arg1, %c0_i32 : i32
    %1 = arith.extui %0 : i1 to i32
    %c0_i32_0 = arith.constant 0 : i32
    %2 = arith.cmpi ne, %1, %c0_i32_0 : i32
    scf.if %2 {
      %cst_21 = arith.constant -1.000000e+30 : f32
      %37 = vector.broadcast %cst_21 : f32 to vector<8x1xf32>
      %c0_22 = arith.constant 0 : index
      %c0_23 = arith.constant 0 : index
      %38 = vector.load %arg5[%c0_22, %c0_23] : memref<8x1xf32, #tpu.memory_space<vmem>>, vector<8x1xf32>
      tpu.vector_store %arg5[%c0_22, %c0_23], %37 {strides = array<i32>} : memref<8x1xf32, #tpu.memory_space<vmem>>, vector<8x1xf32>,
      %cst_24 = arith.constant 0.000000e+00 : f32
      %39 = vector.broadcast %cst_24 : f32 to vector<8x1xf32>
      %c0_25 = arith.constant 0 : index
      %c0_26 = arith.constant 0 : index
      %40 = vector.load %arg6[%c0_25, %c0_26] : memref<8x1xf32, #tpu.memory_space<vmem>>, vector<8x1xf32>
      tpu.vector_store %arg6[%c0_25, %c0_26], %39 {strides = array<i32>} : memref<8x1xf32, #tpu.memory_space<vmem>>, vector<8x1xf32>,
      %cst_27 = arith.constant 0.000000e+00 : f32
      %41 = vector.broadcast %cst_27 : f32 to vector<8x1xf32>
      %c0_28 = arith.constant 0 : index
      %c0_29 = arith.constant 0 : index
      %42 = vector.load %arg7[%c0_28, %c0_29] : memref<8x1xf32, #tpu.memory_space<vmem>>, vector<8x1xf32>
      tpu.vector_store %arg7[%c0_28, %c0_29], %41 {strides = array<i32>} : memref<8x1xf32, #tpu.memory_space<vmem>>, vector<8x1xf32>,
    } else {
    }
    %c0 = arith.constant 0 : index
    %c0_1 = arith.constant 0 : index
    %3 = vector.load %arg2[%c0, %c0_1] : memref<8x128xf32, #tpu.memory_space<vmem>>, vector<8x128xf32>
    %c0_2 = arith.constant 0 : index
    %c0_3 = arith.constant 0 : index
    %4 = vector.load %arg3[%c0_2, %c0_3] : memref<8x1xi32, #tpu.memory_space<vmem>>, vector<8x1xi32>
    %c0_4 = arith.constant 0 : index
    %c0_5 = arith.constant 0 : index
    %5 = vector.load %arg5[%c0_4, %c0_5] : memref<8x1xf32, #tpu.memory_space<vmem>>, vector<8x1xf32>
    %cst = arith.constant dense<0xFF800000> : vector<8xf32>
    %6 = vector.multi_reduction <maximumf>, %3, %cst [1] : vector<8x128xf32> to vector<8xf32>
    %7 = vector.shape_cast %6 : vector<8xf32> to vector<8x1xf32>
    %8 = arith.maximumf %5, %7 : vector<8x1xf32>
    %9 = vector.broadcast %8 : vector<8x1xf32> to vector<8x128xf32>
    %10 = arith.subf %3, %9 : vector<8x128xf32>
    %11 = math.exp %10 : vector<8x128xf32>
    %c0_6 = arith.constant 0 : index
    %c0_7 = arith.constant 0 : index
    %12 = vector.load %arg6[%c0_6, %c0_7] : memref<8x1xf32, #tpu.memory_space<vmem>>, vector<8x1xf32>
    %13 = arith.subf %5, %8 : vector<8x1xf32>
    %14 = math.exp %13 : vector<8x1xf32>
    %15 = arith.mulf %12, %14 : vector<8x1xf32>
    %cst_8 = arith.constant dense<0.000000e+00> : vector<8xf32>
    %16 = vector.multi_reduction <add>, %11, %cst_8 [1] : vector<8x128xf32> to vector<8xf32>
    %17 = vector.shape_cast %16 : vector<8xf32> to vector<8x1xf32>
    %18 = arith.addf %15, %17 : vector<8x1xf32>
    %c0_9 = arith.constant 0 : index
    %c0_10 = arith.constant 0 : index
    %19 = vector.load %arg6[%c0_9, %c0_10] : memref<8x1xf32, #tpu.memory_space<vmem>>, vector<8x1xf32>
    tpu.vector_store %arg6[%c0_9, %c0_10], %18 {strides = array<i32>} : memref<8x1xf32, #tpu.memory_space<vmem>>, vector<8x1xf32>,
    %c0_11 = arith.constant 0 : index
    %c0_12 = arith.constant 0 : index
    %20 = vector.load %arg5[%c0_11, %c0_12] : memref<8x1xf32, #tpu.memory_space<vmem>>, vector<8x1xf32>
    tpu.vector_store %arg5[%c0_11, %c0_12], %8 {strides = array<i32>} : memref<8x1xf32, #tpu.memory_space<vmem>>, vector<8x1xf32>,
    %21 = tpu.iota {dimensions = array<i32: 1>} : vector<8x128xi32>
    %c128_i32 = arith.constant 128 : i32
    %22 = arith.muli %arg1, %c128_i32 : i32
    %23 = vector.broadcast %22 : i32 to vector<8x128xi32>
    %24 = arith.addi %21, %23 : vector<8x128xi32>
    %c0_13 = arith.constant 0 : index
    %c0_14 = arith.constant 0 : index
    %25 = vector.load %arg7[%c0_13, %c0_14] : memref<8x1xf32, #tpu.memory_space<vmem>>, vector<8x1xf32>
    %26 = vector.broadcast %4 : vector<8x1xi32> to vector<8x128xi32>
    %27 = arith.cmpi eq, %24, %26 : vector<8x128xi32>
    %cst_15 = arith.constant 0.000000e+00 : f32
    %28 = vector.broadcast %cst_15 : f32 to vector<8x128xf32>
    %29 = arith.select %27, %3, %28 : vector<8x128xi1>, vector<8x128xf32>
    %cst_16 = arith.constant dense<0.000000e+00> : vector<8xf32>
    %30 = vector.multi_reduction <add>, %29, %cst_16 [1] : vector<8x128xf32> to vector<8xf32>
    %31 = vector.shape_cast %30 : vector<8xf32> to vector<8x1xf32>
    %32 = arith.addf %25, %31 : vector<8x1xf32>
    %c0_17 = arith.constant 0 : index
    %c0_18 = arith.constant 0 : index
    %33 = vector.load %arg7[%c0_17, %c0_18] : memref<8x1xf32, #tpu.memory_space<vmem>>, vector<8x1xf32>
    tpu.vector_store %arg7[%c0_17, %c0_18], %32 {strides = array<i32>} : memref<8x1xf32, #tpu.memory_space<vmem>>, vector<8x1xf32>,
    %c0_i32_19 = arith.constant 0 : i32
    %34 = arith.cmpi eq, %arg1, %c0_i32_19 : i32
    %35 = arith.extui %34 : i1 to i32
    %c0_i32_20 = arith.constant 0 : i32
    %36 = arith.cmpi ne, %35, %c0_i32_20 : i32
    scf.if %36 {
      %c0_21 = arith.constant 0 : index
      %c0_22 = arith.constant 0 : index
      %37 = vector.load %arg5[%c0_21, %c0_22] : memref<8x1xf32, #tpu.memory_space<vmem>>, vector<8x1xf32>
      %c0_23 = arith.constant 0 : index
      %c0_24 = arith.constant 0 : index
      %38 = vector.load %arg6[%c0_23, %c0_24] : memref<8x1xf32, #tpu.memory_space<vmem>>, vector<8x1xf32>
      %39 = math.log %38 : vector<8x1xf32>
      %40 = arith.addf %37, %39 : vector<8x1xf32>
      %c0_25 = arith.constant 0 : index
      %c0_26 = arith.constant 0 : index
      %41 = vector.load %arg7[%c0_25, %c0_26] : memref<8x1xf32, #tpu.memory_space<vmem>>, vector<8x1xf32>
      %42 = arith.subf %40, %41 : vector<8x1xf32>
      %c8_i32 = arith.constant 8 : i32
      %43 = arith.muli %arg0, %c8_i32 : i32
      %44 = tpu.iota {dimensions = array<i32: 0>} : vector<8x1xi32>
      %45 = vector.broadcast %43 : i32 to vector<8x1xi32>
      %46 = arith.addi %45, %44 : vector<8x1xi32>
      %c8_i32_27 = arith.constant 8 : i32
      %47 = vector.broadcast %c8_i32_27 : i32 to vector<8x1xi32>
      %48 = arith.cmpi slt, %46, %47 : vector<8x1xi32>
      %cst_28 = arith.constant 0.000000e+00 : f32
      %49 = vector.broadcast %cst_28 : f32 to vector<8x1xf32>
      %50 = arith.select %48, %42, %49 : vector<8x1xi1>, vector<8x1xf32>
      %51 = vector.shape_cast %50 : vector<8x1xf32> to vector<1x8x1xf32>
      %cst_29 = arith.constant dense<0.000000e+00> : vector<1xf32>
      %52 = vector.multi_reduction <add>, %51, %cst_29 [1, 2] : vector<1x8x1xf32> to vector<1xf32>
      %53 = vector.shape_cast %52 : vector<1xf32> to vector<1x1x1xf32>
      %54 = vector.extract %53[0, 0, 0] : f32 from vector<1x1x1xf32>
      %55 = vector.broadcast %54 : f32 to vector<1x8x128xf32>
      %c0_30 = arith.constant 0 : index
      %c0_31 = arith.constant 0 : index
      %c0_32 = arith.constant 0 : index
      %56 = vector.load %arg4[%c0_30, %c0_31, %c0_32] : memref<1x8x128xf32, #tpu.memory_space<vmem>>, vector<1x8x128xf32>
      tpu.vector_store %arg4[%c0_30, %c0_31, %c0_32], %55 {strides = array<i32>} : memref<1x8x128xf32, #tpu.memory_space<vmem>>, vector<1x8x128xf32>,
    } else {
    }
    return
  }
  func.func @transform_0(%arg0: i32, %arg1: i32) -> (i32, i32) {
    %c0_i32 = arith.constant 0 : i32
    return %arg0, %arg1 : i32, i32
  }
  func.func @transform_1(%arg0: i32, %arg1: i32) -> (i32, i32) {
    %c0_i32 = arith.constant 0 : i32
    %c0_i32_0 = arith.constant 0 : i32
    return %arg0, %c0_i32 : i32, i32
  }
  func.func @transform_2(%arg0: i32, %arg1: i32) -> (i32, i32, i32) {
    %c0_i32 = arith.constant 0 : i32
    %c0_i32_0 = arith.constant 0 : i32
    %c0_i32_1 = arith.constant 0 : i32
    return %arg0, %c0_i32, %c0_i32_0 : i32, i32, i32
  }
}

</mosaic_0001>

<llo_original>
// kernel: tpu_custom_call.1
$region0: #{tpu_custom_call.1}
  #allocation0 [shape = 'u32[]', space=smem, size = 0x4, offset = 0x4, fixed_abs, tag = 'smem constant byte address 0x4 - core index']
  #allocation1 [shape = 'u32[144,128]{1,0:T(1,128)}', space=vmem, size = 0x12000, scoped, tag = 'internal scratch']
  #allocation2 [shape = 'f32[8,1]{1,0:T(8,128)}', space=vmem, size = 0x1000, scoped, tag = 'scratch operand']
  #allocation3 [shape = 'f32[8,1]{1,0:T(8,128)}', space=vmem, size = 0x1000, scoped, tag = 'scratch operand']
  #allocation4 [shape = 'f32[8,1]{1,0:T(8,128)}', space=vmem, size = 0x1000, scoped, tag = 'scratch operand']
  %s0 = inlined_call_operand.vmem [shape: f32[8,128], index: 0, kind: input, shape index: {}]
  %s1 = inlined_call_operand.vmem [shape: s32[8,1], index: 1, kind: input, shape index: {}]
  %s2 = inlined_call_operand.hbm [shape: f32[1,8,128], index: 2, kind: output, shape index: {}]
  %s3 = sld [smem:[#allocation0]]
  $region26: #{tpu_custom_call.1} parent=0
    _
  %s5 = ssub.s32 1, %s3
  %s6 = scalar_select 0, %s5, %s3
  $region1: #{tpu_custom_call.1} parent=0
    #allocation5 [shape = 'u8[4096]{0}', space=vmem, size = 0x1000, scoped, tag = 'output window, operand 0, single buffered']
    #allocation6 [shape = 's32[1]{0}', space=sflag, size = 0x4, scoped, tag = 'scoped memory for tpu_custom_call.1']
    %7 = vsyncpa [#allocation6], 0
    // Predicated region
    $region2: #{tpu_custom_call.1} parent=1 // pred_check
      _
    $region3: #{tpu_custom_call.1} parent=1 // pred_check_branch
      %9 = sbr.rel (0) target = $region5
    $region4: #{tpu_custom_call.1} parent=1 // pred_region
      _
    $region5: #{tpu_custom_call.1} parent=1 // pred_fallthru
      _
    // Predicated region
    $region6: #{tpu_custom_call.1} parent=1 // pred_check
      _
    $region7: #{tpu_custom_call.1} parent=1 // pred_check_branch
      %11 = sbr.rel (0) target = $region9
    $region8: #{tpu_custom_call.1} parent=1 // pred_region
      _
    $region9: #{tpu_custom_call.1} parent=1 // pred_fallthru
      _
    %p12 = scmp.eq.s32.totalorder 0, 0
    // Predicated region
    $region10: #{tpu_custom_call.1} parent=1 // pred_check
      %p13 = pneg %p12
    $region11: #{tpu_custom_call.1} parent=1 // pred_check_branch
      %15 = sbr.rel (%p13) target = $region13
    $region12: #{tpu_custom_call.1} parent=1 // pred_region
      %vm16 = vcmask 7168
      %17 = vst.msk [vmem:[#allocation2] sm:$0xff] %vm16, -1e+30
      %18 = vst.msk [vmem:[#allocation3] sm:$0xff] %vm16, 0.0
      %19 = vst.msk [vmem:[#allocation4] sm:$0xff] %vm16, 0.0
    $region13: #{tpu_custom_call.1} parent=1 // pred_fallthru
      _
    %v20 = vld [vmem:[%s0] sm:$0xff]
    %v21 = vld [vmem:[%s1] sm:$0xff]
    %v22 = vld [vmem:[#allocation2] sm:$0xff]
    %23 = vmax.xlane.f32.xlu0 %v20
    %v24 = vpop.xlane.xlu0 %23
    %v25 = vmax.f32 %v22, %v24
    %27 = vset.pattern.permute.xlu0 0
    %28 = vperm.xlu0 %27, %v25
    %v29 = vpop.permute.xlu0 %28
    %v31 = vsub.f32 %v20, %v29
    %v32 = vmul.f32 %v31, 1.442695
    %v33 = vpow.pop %v32
    %v34 = vld [vmem:[#allocation3] sm:$0xff]
    %v35 = vsub.f32 %v22, %v25
    %v36 = vmul.f32 %v35, 1.442695
    %v37 = vpow.pop %v36
    %v38 = vmul.f32 %v34, %v37
    %39 = vadd.xlane.f32.xlu0 %v33
    %v40 = vpop.xlane.xlu0 %39
    %v41 = vadd.f32 %v38, %v40
    %vm42 = vcmask 7168
    %43 = vst.msk [vmem:[#allocation3] sm:$0xff] %vm42, %v41
    %44 = vst.msk [vmem:[#allocation2] sm:$0xff] %vm42, %v25
    %v45 = vlaneseq
    %v46 = vand.u32 %v45, 127
    %s47 = smul.u32 0, 128
    %v48 = vstv %s47
    %v49 = vadd.s32 %v46, %v48
    %v50 = vld [vmem:[#allocation4] sm:$0xff]
    %51 = vset.pattern.permute.xlu0 0
    %52 = vperm.xlu0 %51, %v21
    %v53 = vpop.permute.xlu0 %52
    %vm54 = vcmp.eq.s32.totalorder %v49, %v53
    %v55 = vsel %vm54, %v20, 0.0
    %56 = vadd.xlane.f32.xlu0 %v55
    %v57 = vpop.xlane.xlu0 %56
    %v58 = vadd.f32 %v50, %v57
    %59 = vst.msk [vmem:[#allocation4] sm:$0xff] %vm42, %v58
    // Predicated region
    $region14: #{tpu_custom_call.1} parent=1 // pred_check
      %p60 = pneg %p12
    $region15: #{tpu_custom_call.1} parent=1 // pred_check_branch
      %62 = sbr.rel (%p60) target = $region17
    $region16: #{tpu_custom_call.1} parent=1 // pred_region
      %v63 = vld [vmem:[#allocation2] sm:$0xff]
      %v64 = vld [vmem:[#allocation3] sm:$0xff]
      %v65 = vlog2.pop %v64
      %v66 = vmul.f32 %v65, 0.6931472
      %v67 = vadd.f32 %v63, %v66
      %v68 = vld [vmem:[#allocation4] sm:$0xff]
      %v69 = vsub.f32 %v67, %v68
      %s70 = smul.u32 0, 8
      %v71 = vlaneseq
      %v72 = vshrl.u32 %v71, 7
      %v73 = vstv %s70
      %v74 = vadd.s32 %v73, %v72
      %vm75 = vcmp.lt.s32.totalorder %v74, 8
      %v76 = vsel %vm75, %v69, 0.0
      %v77 = vsel %vm42, %v76, 0.0
      %78 = vadd.xlane.f32.xlu0 %v77
      %v79 = vpop.xlane.xlu0 %78
      %v80 = vrot.slane %v79, 4
      %v81 = vadd.f32 %v79, %v80
      %v82 = vrot.slane %v81, 2
      %v83 = vadd.f32 %v81, %v82
      %v84 = vrot.slane %v83, 1
      %v85 = vadd.f32 %v83, %v84
      %s86 = vtos %v85
      %v87 = vstv %s86
      %88 = vst [vmem:[#allocation5] sm:$0xff] %v87
    $region17: #{tpu_custom_call.1} parent=1 // pred_fallthru
      _
    // Predicated region
    $region18: #{tpu_custom_call.1} parent=1 // pred_check
      _
    $region19: #{tpu_custom_call.1} parent=1 // pred_check_branch
      %90 = sbr.rel (0) target = $region21
    $region20: #{tpu_custom_call.1} parent=1 // pred_region
      %s92 = ssub.s32 128, 128
      %93 = vsyncadd [#allocation6], %s92
      %s95 = sshll.u32 [#allocation5], 4
      %s96 = int_to_ptr.vmem [resolvable:$true] %s95
      %98 = dma.vmem_to_hbm [thread:$0]  %s96, 128, %s2, [#allocation6]
    $region21: #{tpu_custom_call.1} parent=1 // pred_fallthru
      _
    // Predicated region
    $region22: #{tpu_custom_call.1} parent=1 // pred_check
      _
    $region23: #{tpu_custom_call.1} parent=1 // pred_check_branch
      %100 = sbr.rel (0) target = $region25
    $region24: #{tpu_custom_call.1} parent=1 // pred_region
      %101 = dma.done [#allocation6], 128
    $region25: #{tpu_custom_call.1} parent=1 // pred_fallthru
      _
    %102 = vsyncpa [#allocation6], 1

</llo_original>
